<compile_context>
chip_gen: v7x
topology: tpu7x:2x2x1
jax: 0.10.0
libtpu: 0.0.40
codegen_flags: <defaults>
</compile_context>

<pallas_src>
import functools

import jax
import jax.numpy as jnp
from jax import lax
from jax.experimental import pallas as pl
from jax.experimental.pallas import tpu as pltpu

EPS = 1e-20  # matches the module's _sample_gumble eps


def _gumbel_from_uniform(u):
    """Gumbel(0,1) noise from uniform [0,1) samples (module's formula)."""
    return -jnp.log(-jnp.log(u + EPS) + EPS)


# ---------------------------------------------------------------------------
# Kernels
# ---------------------------------------------------------------------------
def _soft_kernel(logits_ref, u_ref, out_ref, *, inv_temp):
    """Per-tile gumbel-softmax distribution over the (padded) class axis."""
    y = logits_ref[...].astype(jnp.float32) + _gumbel_from_uniform(u_ref[...])
    z = y * inv_temp
    z = z - jnp.max(z, axis=-1, keepdims=True)
    e = jnp.exp(z)  # padded cols are exp(-inf) = 0 -> exact normalization
    out_ref[...] = (e / jnp.sum(e, axis=-1, keepdims=True)).astype(out_ref.dtype)
    # NOTE: rows past `batch` in a partial last tile compute on garbage, but
    # their stores are dropped by Pallas, so outputs stay correct.


def _hard_kernel(logits_ref, u_ref, mask_ref, *, batch):
    """Per-tile union-of-argmax-columns mask (softmax skipped: argmax-invariant).

    Writes an (8, N_pad) sublane/lane-dense partial mask per tile; the tiny
    cross-tile max reduction happens in the wrapper (keeps the grid fully
    parallel so both v7x TensorCores can share it).
    """
    i = pl.program_id(0)
    tb, n = logits_ref.shape

    y = logits_ref[...].astype(jnp.float32) + _gumbel_from_uniform(u_ref[...])
    col = lax.broadcasted_iota(jnp.int32, (tb, n), 1)
    row = lax.broadcasted_iota(jnp.int32, (tb, n), 0)

    # Per-row argmax, first index wins on ties (like torch.max).
    maxy = jnp.max(y, axis=-1, keepdims=True)
    idx = jnp.min(jnp.where(y >= maxy, col, n), axis=-1, keepdims=True)  # (tb, 1)

    # Union over valid (non-padded) rows of this tile.
    valid = (i * tb + row) < batch
    match = jnp.where((col == idx) & valid, jnp.float32(1.0), jnp.float32(0.0))
    row_mask = jnp.max(match, axis=0, keepdims=True)                     # (1, n)
    mask_ref[...] = jnp.broadcast_to(row_mask, mask_ref.shape)           # (8, n)


# ---------------------------------------------------------------------------
# Tiling / budgeting helpers
# ---------------------------------------------------------------------------
def _vmem_budget_bytes():
    """Generation-aware VMEM budget for tile sizing (conservative headroom)."""
    default = 12 * 1024 * 1024
    try:
        info = pltpu.get_tpu_info()
        cap = int(getattr(info, "vmem_capacity_bytes", 0)) or 128 * 1024 * 1024
    except Exception:
        return default
    # ~1/4 of physical VMEM, capped at 24 MiB (v5e/v6e: 128 MiB -> 24 MiB;
    # v7x: 64 MiB -> 16 MiB).
    return int(min(24 * 1024 * 1024, max(default, cap // 4)))


def _choose_block_rows(batch, n_pad, n_buffers, budget_bytes, requested=None):
    """Batch-tile rows: as large as the budget allows; multiple of 8 when tiled."""
    if requested is None:
        per_row = n_buffers * n_pad * 4            # f32 bytes/row across live buffers
        tb = (budget_bytes // per_row // 8) * 8
        tb = max(8, min(4096, tb))
    else:
        tb = max(1, int(requested))
    if batch <= tb:
        return batch                               # single full-extent block
    return max(8, (tb // 8) * 8)


# ---------------------------------------------------------------------------
# Wrapper (forward pass)
# ---------------------------------------------------------------------------
def gumbel_softmax_sampling(logits, *, key=None, uniform_noise=None,
                            temperature=1.0, hard=True, block_rows=None):
    """Forward of GumbelSoftmaxSampling.  logits: (B, N) float32/bfloat16."""
    orig_dtype = logits.dtype
    B, N = logits.shape

    if uniform_noise is None:
        if key is None:
            key = jax.random.PRNGKey(0)
        uniform_noise = jax.random.uniform(key, (B, N), dtype=jnp.float32)
    u = uniform_noise.astype(jnp.float32)

    # Lane-dense layout: pad the class axis to a multiple of 128. Padded
    # logits are -inf (never win argmax, contribute exp(-inf)=0 to softmax);
    # padded noise is a harmless constant.
    n_pad = max(128, ((N + 127) // 128) * 128)
    if n_pad != N:
        logits_p = jnp.pad(logits, ((0, 0), (0, n_pad - N)),
                           constant_values=-jnp.inf)
        u_p = jnp.pad(u, ((0, 0), (0, n_pad - N)), constant_values=0.5)
    else:
        logits_p, u_p = logits, u

    budget = _vmem_budget_bytes()
    vmem_limit = int(min(32 * 1024 * 1024, budget * 2))

    if hard:
        # 2 input streams x double-buffer; output is a tiny (8, n_pad) block.
        tb = _choose_block_rows(B, n_pad, 4, budget, block_rows)
        num_tiles = pl.cdiv(B, tb)
        partial = pl.pallas_call(
            functools.partial(_hard_kernel, batch=B),
            out_shape=jax.ShapeDtypeStruct((num_tiles * 8, n_pad), jnp.float32),
            grid=(num_tiles,),
            in_specs=[pl.BlockSpec((tb, n_pad), lambda i: (i, 0)),
                      pl.BlockSpec((tb, n_pad), lambda i: (i, 0))],
            out_specs=pl.BlockSpec((8, n_pad), lambda i: (i, 0)),
            compiler_params=pltpu.CompilerParams(
                dimension_semantics=("parallel",),
                vmem_limit_bytes=vmem_limit),
        )(logits_p, u_p)
        mask_row = jnp.max(partial, axis=0)[:N]        # union of argmax columns
        # y_hard: zeros everywhere except row 0 (module's quirky scatter).
        # NOTE: this dense (B, N) materialization is a separate XLA op; return
        # `mask_row` directly if the consumer can take the 1-row mask.
        return jnp.pad(mask_row[None, :].astype(orig_dtype), ((0, B - 1), (0, 0)))

    # 3 streams (logits, noise, dist) x double-buffer.
    tb = _choose_block_rows(B, n_pad, 6, budget, block_rows)
    out = pl.pallas_call(
        functools.partial(_soft_kernel, inv_temp=1.0 / float(temperature)),
        out_shape=jax.ShapeDtypeStruct((B, n_pad), orig_dtype),
        grid=(pl.cdiv(B, tb),),
        in_specs=[pl.BlockSpec((tb, n_pad), lambda i: (i, 0)),
                  pl.BlockSpec((tb, n_pad), lambda i: (i, 0))],
        out_specs=pl.BlockSpec((tb, n_pad), lambda i: (i, 0)),
        compiler_params=pltpu.CompilerParams(
            dimension_semantics=("parallel",),
            vmem_limit_bytes=vmem_limit),
    )(logits_p, u_p)
    return out[:, :N]


# ---------------------------------------------------------------------------
# Pure-JAX reference (mirrors the PyTorch forward) and demo
# ---------------------------------------------------------------------------
def _reference(logits, u, temperature, hard):
    y = logits.astype(jnp.float32) + _gumbel_from_uniform(u.astype(jnp.float32))
    dist = jax.nn.softmax(y / temperature, axis=1)
    if not hard:
        return dist
    idx = jnp.argmax(y, axis=-1)                      # == argmax(dist) for T > 0
    return jnp.zeros_like(dist).at[0, idx].set(1.0)


if __name__ == "__main__":
    key = jax.random.PRNGKey(0)
    k_logits, k_u1, k_u2, k_logits2 = jax.random.split(key, 4)

    B, N = 64, 8  # (batch, num_actions) routing-decision shape
    logits = jax.random.normal(k_logits, (B, N), dtype=jnp.float32)

    # hard=True (module default), single-tile fast path.
    u1 = jax.random.uniform(k_u1, (B, N), dtype=jnp.float32)
    out_hard = gumbel_softmax_sampling(logits, uniform_noise=u1,
                                       temperature=1.0, hard=True)
    jax.block_until_ready(out_hard)
    ref_hard = _reference(logits, u1, 1.0, True)
    assert out_hard.shape == (B, N) and out_hard.dtype == jnp.float32
    assert bool(jnp.all(out_hard[1:] == 0.0))                  # only row 0 written
    assert bool(jnp.all(out_hard == ref_hard))

    # hard=True with a forced multi-tile grid and a partial last tile
    # (exercises the per-tile partial masks + cross-tile max + row masking).
    B2 = 20
    logits2 = jax.random.normal(k_logits2, (B2, N), dtype=jnp.float32)
    u2 = jax.random.uniform(k_u2, (B2, N), dtype=jnp.float32)
    out_hard2 = gumbel_softmax_sampling(logits2, uniform_noise=u2,
                                        temperature=1.0, hard=True, block_rows=8)
    jax.block_until_ready(out_hard2)
    assert bool(jnp.all(out_hard2 == _reference(logits2, u2, 1.0, True)))

    # hard=False: full gumbel-softmax distribution.
    out_soft = gumbel_softmax_sampling(logits, uniform_noise=u1,
                                       temperature=0.7, hard=False)
    jax.block_until_ready(out_soft)
    ref_soft = _reference(logits, u1, 0.7, False)
    assert out_soft.shape == (B, N) and out_soft.dtype == jnp.float32
    assert bool(jnp.all(jnp.isfinite(out_soft))) and bool(jnp.all(out_soft >= 0.0))
    assert bool(jnp.all(jnp.abs(out_soft - ref_soft) < 1e-3))
    assert bool(jnp.all(jnp.abs(jnp.sum(out_soft, axis=-1) - 1.0) < 1e-4))

    print("KERNEL_OK")
</pallas_src>

<mosaic_0001>
module attributes {stable_mosaic.version = 11 : i64} {
  func.func @_hard_kernel(%arg0: i32, %arg1: memref<64x128xf32, #tpu.memory_space<vmem>>, %arg2: memref<64x128xf32, #tpu.memory_space<vmem>>, %arg3: memref<8x128xf32, #tpu.memory_space<vmem>>) attributes {dimension_semantics = [#tpu.dimension_semantics<parallel>], iteration_bounds = array<i64: 1>, scalar_prefetch = 0 : i64, scratch_operands = 0 : i64, tpu.core_type = #tpu.core_type<tc>, window_params = [{transform_indices = @transform_0, window_bounds = array<i64: 64, 128>}, {transform_indices = @transform_1, window_bounds = array<i64: 64, 128>}, {transform_indices = @transform_2, window_bounds = array<i64: 8, 128>}]} {
    %c0 = arith.constant 0 : index
    %c0_0 = arith.constant 0 : index
    %0 = vector.load %arg1[%c0, %c0_0] : memref<64x128xf32, #tpu.memory_space<vmem>>, vector<64x128xf32>
    %c0_1 = arith.constant 0 : index
    %c0_2 = arith.constant 0 : index
    %1 = vector.load %arg2[%c0_1, %c0_2] : memref<64x128xf32, #tpu.memory_space<vmem>>, vector<64x128xf32>
    %cst = arith.constant 9.99999968E-21 : f32
    %2 = vector.broadcast %cst : f32 to vector<64x128xf32>
    %3 = arith.addf %1, %2 : vector<64x128xf32>
    %4 = math.log %3 : vector<64x128xf32>
    %cst_3 = arith.constant 0.000000e+00 : f32
    %5 = vector.broadcast %cst_3 : f32 to vector<64x128xf32>
    %6 = arith.subf %5, %4 : vector<64x128xf32>
    %cst_4 = arith.constant 9.99999968E-21 : f32
    %7 = vector.broadcast %cst_4 : f32 to vector<64x128xf32>
    %8 = arith.addf %6, %7 : vector<64x128xf32>
    %9 = math.log %8 : vector<64x128xf32>
    %cst_5 = arith.constant 0.000000e+00 : f32
    %10 = vector.broadcast %cst_5 : f32 to vector<64x128xf32>
    %11 = arith.subf %10, %9 : vector<64x128xf32>
    %12 = arith.addf %0, %11 : vector<64x128xf32>
    %13 = tpu.iota {dimensions = array<i32: 1>} : vector<64x128xi32>
    %14 = tpu.iota {dimensions = array<i32: 0>} : vector<64x128xi32>
    %cst_6 = arith.constant dense<0xFF800000> : vector<64xf32>
    %15 = vector.multi_reduction <maximumf>, %12, %cst_6 [1] : vector<64x128xf32> to vector<64xf32>
    %16 = vector.shape_cast %15 : vector<64xf32> to vector<64x1xf32>
    %17 = vector.broadcast %16 : vector<64x1xf32> to vector<64x128xf32>
    %18 = arith.cmpf oge, %12, %17 : vector<64x128xf32>
    %c128_i32 = arith.constant 128 : i32
    %19 = vector.broadcast %c128_i32 : i32 to vector<64x128xi32>
    %20 = arith.select %18, %13, %19 : vector<64x128xi1>, vector<64x128xi32>
    %cst_7 = arith.constant dense<2147483647> : vector<64xi32>
    %21 = vector.multi_reduction <minsi>, %20, %cst_7 [1] : vector<64x128xi32> to vector<64xi32>
    %22 = vector.shape_cast %21 : vector<64xi32> to vector<64x1xi32>
    %c64_i32 = arith.constant 64 : i32
    %23 = arith.muli %arg0, %c64_i32 : i32
    %24 = vector.broadcast %23 : i32 to vector<64x128xi32>
    %25 = arith.addi %24, %14 : vector<64x128xi32>
    %c64_i32_8 = arith.constant 64 : i32
    %26 = vector.broadcast %c64_i32_8 : i32 to vector<64x128xi32>
    %27 = arith.cmpi slt, %25, %26 : vector<64x128xi32>
    %28 = vector.broadcast %22 : vector<64x1xi32> to vector<64x128xi32>
    %29 = arith.cmpi eq, %13, %28 : vector<64x128xi32>
    %30 = arith.andi %29, %27 : vector<64x128xi1>
    %cst_9 = arith.constant 1.000000e+00 : f32
    %cst_10 = arith.constant 0.000000e+00 : f32
    %31 = vector.broadcast %cst_9 : f32 to vector<64x128xf32>
    %32 = vector.broadcast %cst_10 : f32 to vector<64x128xf32>
    %33 = arith.select %30, %31, %32 : vector<64x128xi1>, vector<64x128xf32>
    %cst_11 = arith.constant dense<0xFF800000> : vector<128xf32>
    %34 = vector.multi_reduction <maximumf>, %33, %cst_11 [0] : vector<64x128xf32> to vector<128xf32>
    %35 = vector.shape_cast %34 : vector<128xf32> to vector<1x128xf32>
    %36 = vector.shape_cast %35 : vector<1x128xf32> to vector<1x128xf32>
    %37 = vector.broadcast %36 : vector<1x128xf32> to vector<8x128xf32>
    %c0_12 = arith.constant 0 : index
    %c0_13 = arith.constant 0 : index
    %38 = vector.load %arg3[%c0_12, %c0_13] : memref<8x128xf32, #tpu.memory_space<vmem>>, vector<8x128xf32>
    tpu.vector_store %arg3[%c0_12, %c0_13], %37 {strides = array<i32>} : memref<8x128xf32, #tpu.memory_space<vmem>>, vector<8x128xf32>,
    return
  }
  func.func @transform_0(%arg0: i32) -> (i32, i32) {
    %c0_i32 = arith.constant 0 : i32
    %c0_i32_0 = arith.constant 0 : i32
    return %arg0, %c0_i32 : i32, i32
  }
  func.func @transform_1(%arg0: i32) -> (i32, i32) {
    %c0_i32 = arith.constant 0 : i32
    %c0_i32_0 = arith.constant 0 : i32
    return %arg0, %c0_i32 : i32, i32
  }
  func.func @transform_2(%arg0: i32) -> (i32, i32) {
    %c0_i32 = arith.constant 0 : i32
    %c0_i32_0 = arith.constant 0 : i32
    return %arg0, %c0_i32 : i32, i32
  }
}

</mosaic_0001>

<llo_original>
// kernel: tpu_custom_call.1
$region0: #{tpu_custom_call.1}
  #allocation0 [shape = 'u32[]', space=smem, size = 0x4, offset = 0x4, fixed_abs, tag = 'smem constant byte address 0x4 - core index']
  #allocation1 [shape = 'u32[144,128]{1,0:T(1,128)}', space=vmem, size = 0x12000, scoped, tag = 'internal scratch']
  %s0 = inlined_call_operand.hbm [shape: f32[64,128], index: 0, kind: input, shape index: {}]
  %s1 = inlined_call_operand.hbm [shape: f32[64,128], index: 1, kind: input, shape index: {}]
  %s2 = inlined_call_operand.hbm [shape: f32[8,128], index: 2, kind: output, shape index: {}]
  %s3 = sld [smem:[#allocation0]]
  $region26: #{tpu_custom_call.1} parent=0
    _
  %s5 = ssub.s32 1, %s3
  %s6 = scalar_select 0, %s5, %s3
  $region1: #{tpu_custom_call.1} parent=0
    #allocation2 [shape = 'u8[32768]{0}', space=vmem, size = 0x8000, scoped, tag = 'input window, operand 0, single buffered']
    #allocation3 [shape = 's32[1]{0}', space=sflag, size = 0x4, scoped, tag = 'scoped memory for tpu_custom_call.1']
    #allocation4 [shape = 's32[1]{0}', space=sflag, size = 0x4, scoped, tag = 'scoped memory for tpu_custom_call.1']
    #allocation5 [shape = 'u8[32768]{0}', space=vmem, size = 0x8000, scoped, tag = 'input window, operand 1, single buffered']
    #allocation6 [shape = 's32[1]{0}', space=sflag, size = 0x4, scoped, tag = 'scoped memory for tpu_custom_call.1']
    #allocation7 [shape = 'u8[4096]{0}', space=vmem, size = 0x1000, scoped, tag = 'output window, operand 0, single buffered']
    %7 = vsyncpa [#allocation3], 0
    %8 = vsyncpa [#allocation6], 0
    %9 = vsyncpa [#allocation4], 0
    // Predicated region
    $region2: #{tpu_custom_call.1} parent=1 // pred_check
      _
    $region3: #{tpu_custom_call.1} parent=1 // pred_check_branch
      %11 = sbr.rel (0) target = $region5
    $region4: #{tpu_custom_call.1} parent=1 // pred_region
      %s13 = ssub.s32 1024, 1024
      %14 = vsyncadd [#allocation3], %s13
      %s15 = sshll.u32 [#allocation2], 4
      %s16 = int_to_ptr.vmem [resolvable:$true] %s15
      %21 = dma.hbm_to_vmem [thread:$0]  %s0, 1024, %s16, [#allocation3], 128, 128, 8
    $region5: #{tpu_custom_call.1} parent=1 // pred_fallthru
      _
    // Predicated region
    $region6: #{tpu_custom_call.1} parent=1 // pred_check
      _
    $region7: #{tpu_custom_call.1} parent=1 // pred_check_branch
      %23 = sbr.rel (0) target = $region9
    $region8: #{tpu_custom_call.1} parent=1 // pred_region
      %s25 = ssub.s32 1024, 1024
      %26 = vsyncadd [#allocation6], %s25
      %s27 = sshll.u32 [#allocation5], 4
      %s28 = int_to_ptr.vmem [resolvable:$true] %s27
      %33 = dma.hbm_to_vmem [thread:$0]  %s1, 1024, %s28, [#allocation6], 128, 128, 8
    $region9: #{tpu_custom_call.1} parent=1 // pred_fallthru
      _
    // Predicated region
    $region10: #{tpu_custom_call.1} parent=1 // pred_check
      _
    $region11: #{tpu_custom_call.1} parent=1 // pred_check_branch
      %35 = sbr.rel (0) target = $region13
    $region12: #{tpu_custom_call.1} parent=1 // pred_region
      %36 = dma.done [#allocation3], 1024
    $region13: #{tpu_custom_call.1} parent=1 // pred_fallthru
      _
    // Predicated region
    $region14: #{tpu_custom_call.1} parent=1 // pred_check
      _
    $region15: #{tpu_custom_call.1} parent=1 // pred_check_branch
      %38 = sbr.rel (0) target = $region17
    $region16: #{tpu_custom_call.1} parent=1 // pred_region
      %39 = dma.done [#allocation6], 1024
    $region17: #{tpu_custom_call.1} parent=1 // pred_fallthru
      _
    %v40 = vld [vmem:[#allocation2] sm:$0xff]
    %v41 = vld [vmem:[#allocation2 + $0x8] sm:$0xff]
    %v42 = vld [vmem:[#allocation2 + $0x10] sm:$0xff]
    %v43 = vld [vmem:[#allocation2 + $0x18] sm:$0xff]
    %v44 = vld [vmem:[#allocation2 + $0x20] sm:$0xff]
    %v45 = vld [vmem:[#allocation2 + $0x28] sm:$0xff]
    %v46 = vld [vmem:[#allocation2 + $0x30] sm:$0xff]
    %v47 = vld [vmem:[#allocation2 + $0x38] sm:$0xff]
    %v48 = vld [vmem:[#allocation5] sm:$0xff]
    %v49 = vld [vmem:[#allocation5 + $0x8] sm:$0xff]
    %v50 = vld [vmem:[#allocation5 + $0x10] sm:$0xff]
    %v51 = vld [vmem:[#allocation5 + $0x18] sm:$0xff]
    %v52 = vld [vmem:[#allocation5 + $0x20] sm:$0xff]
    %v53 = vld [vmem:[#allocation5 + $0x28] sm:$0xff]
    %v54 = vld [vmem:[#allocation5 + $0x30] sm:$0xff]
    %v55 = vld [vmem:[#allocation5 + $0x38] sm:$0xff]
    %v56 = vadd.f32 %v48, 1e-20
    %v57 = vadd.f32 %v49, 1e-20
    %v58 = vadd.f32 %v50, 1e-20
    %v59 = vadd.f32 %v51, 1e-20
    %v60 = vadd.f32 %v52, 1e-20
    %v61 = vadd.f32 %v53, 1e-20
    %v62 = vadd.f32 %v54, 1e-20
    %v63 = vadd.f32 %v55, 1e-20
    %v64 = vlog2.pop %v56
    %v65 = vmul.f32 %v64, 0.6931472
    %v66 = vlog2.pop %v57
    %v67 = vmul.f32 %v66, 0.6931472
    %v68 = vlog2.pop %v58
    %v69 = vmul.f32 %v68, 0.6931472
    %v70 = vlog2.pop %v59
    %v71 = vmul.f32 %v70, 0.6931472
    %v72 = vlog2.pop %v60
    %v73 = vmul.f32 %v72, 0.6931472
    %v74 = vlog2.pop %v61
    %v75 = vmul.f32 %v74, 0.6931472
    %v76 = vlog2.pop %v62
    %v77 = vmul.f32 %v76, 0.6931472
    %v78 = vlog2.pop %v63
    %v79 = vmul.f32 %v78, 0.6931472
    %v80 = vsub.f32 0.0, %v65
    %v81 = vsub.f32 0.0, %v67
    %v82 = vsub.f32 0.0, %v69
    %v83 = vsub.f32 0.0, %v71
    %v84 = vsub.f32 0.0, %v73
    %v85 = vsub.f32 0.0, %v75
    %v86 = vsub.f32 0.0, %v77
    %v87 = vsub.f32 0.0, %v79
    %v88 = vadd.f32 %v80, 1e-20
    %v89 = vadd.f32 %v81, 1e-20
    %v90 = vadd.f32 %v82, 1e-20
    %v91 = vadd.f32 %v83, 1e-20
    %v92 = vadd.f32 %v84, 1e-20
    %v93 = vadd.f32 %v85, 1e-20
    %v94 = vadd.f32 %v86, 1e-20
    %v95 = vadd.f32 %v87, 1e-20
    %v96 = vlog2.pop %v88
    %v97 = vmul.f32 %v96, 0.6931472
    %v98 = vlog2.pop %v89
    %v99 = vmul.f32 %v98, 0.6931472
    %v100 = vlog2.pop %v90
    %v101 = vmul.f32 %v100, 0.6931472
    %v102 = vlog2.pop %v91
    %v103 = vmul.f32 %v102, 0.6931472
    %v104 = vlog2.pop %v92
    %v105 = vmul.f32 %v104, 0.6931472
    %v106 = vlog2.pop %v93
    %v107 = vmul.f32 %v106, 0.6931472
    %v108 = vlog2.pop %v94
    %v109 = vmul.f32 %v108, 0.6931472
    %v110 = vlog2.pop %v95
    %v111 = vmul.f32 %v110, 0.6931472
    %v112 = vsub.f32 0.0, %v97
    %v113 = vsub.f32 0.0, %v99
    %v114 = vsub.f32 0.0, %v101
    %v115 = vsub.f32 0.0, %v103
    %v116 = vsub.f32 0.0, %v105
    %v117 = vsub.f32 0.0, %v107
    %v118 = vsub.f32 0.0, %v109
    %v119 = vsub.f32 0.0, %v111
    %v120 = vadd.f32 %v40, %v112
    %v121 = vadd.f32 %v41, %v113
    %v122 = vadd.f32 %v42, %v114
    %v123 = vadd.f32 %v43, %v115
    %v124 = vadd.f32 %v44, %v116
    %v125 = vadd.f32 %v45, %v117
    %v126 = vadd.f32 %v46, %v118
    %v127 = vadd.f32 %v47, %v119
    %v128 = vlaneseq
    %v129 = vand.u32 %v128, 127
    %v130 = vlaneseq
    %v131 = vshrl.u32 %v130, 7
    %v132 = vadd.s32 %v131, 8
    %v133 = vadd.s32 %v131, 16
    %v134 = vadd.s32 %v131, 24
    %v135 = vadd.s32 %v131, 32
    %v136 = vadd.s32 %v131, 40
    %v137 = vadd.s32 %v131, 48
    %v138 = vadd.s32 %v131, 56
    %139 = vmax.xlane.f32.xlu0 %v120
    %v140 = vpop.xlane.xlu0 %139
    %141 = vmax.xlane.f32.xlu0 %v121
    %v142 = vpop.xlane.xlu0 %141
    %143 = vmax.xlane.f32.xlu0 %v122
    %v144 = vpop.xlane.xlu0 %143
    %145 = vmax.xlane.f32.xlu0 %v123
    %v146 = vpop.xlane.xlu0 %145
    %147 = vmax.xlane.f32.xlu0 %v124
    %v148 = vpop.xlane.xlu0 %147
    %149 = vmax.xlane.f32.xlu0 %v125
    %v150 = vpop.xlane.xlu0 %149
    %151 = vmax.xlane.f32.xlu0 %v126
    %v152 = vpop.xlane.xlu0 %151
    %153 = vmax.xlane.f32.xlu0 %v127
    %v154 = vpop.xlane.xlu0 %153
    %vm155 = vcmp.ge.f32.partialorder %v120, %v140
    %vm156 = vcmp.ge.f32.partialorder %v121, %v142
    %vm157 = vcmp.ge.f32.partialorder %v122, %v144
    %vm158 = vcmp.ge.f32.partialorder %v123, %v146
    %vm159 = vcmp.ge.f32.partialorder %v124, %v148
    %vm160 = vcmp.ge.f32.partialorder %v125, %v150
    %vm161 = vcmp.ge.f32.partialorder %v126, %v152
    %vm162 = vcmp.ge.f32.partialorder %v127, %v154
    %v163 = vsel %vm155, %v129, 128
    %v164 = vsel %vm156, %v129, 128
    %v165 = vsel %vm157, %v129, 128
    %v166 = vsel %vm158, %v129, 128
    %v167 = vsel %vm159, %v129, 128
    %v168 = vsel %vm160, %v129, 128
    %v169 = vsel %vm161, %v129, 128
    %v170 = vsel %vm162, %v129, 128
    %v171 = vand.u32 %v163, 65535
    %v172 = vshra.s32 %v163, 16
    %v173 = vcvt.s32.f32 %v171
    %v174 = vcvt.s32.f32 %v172
    %175 = vmin.xlane.f32.xlu0 %v174
    %v176 = vpop.xlane.xlu0 %175
    %vm177 = vcmp.eq.f32.partialorder %v174, %v176
    %v178 = vsel %vm177, %v173, inf
    %179 = vmin.xlane.f32.xlu0 %v178
    %v180 = vpop.xlane.xlu0 %179
    %v181 = vcvt.f32.s32 %v180
    %v182 = vcvt.f32.s32 %v176
    %v183 = vshll.u32 %v182, 16
    %v184 = vadd.s32 %v183, %v181
    %v185 = vand.u32 %v164, 65535
    %v186 = vshra.s32 %v164, 16
    %v187 = vcvt.s32.f32 %v185
    %v188 = vcvt.s32.f32 %v186
    %189 = vmin.xlane.f32.xlu0 %v188
    %v190 = vpop.xlane.xlu0 %189
    %vm191 = vcmp.eq.f32.partialorder %v188, %v190
    %v192 = vsel %vm191, %v187, inf
    %193 = vmin.xlane.f32.xlu0 %v192
    %v194 = vpop.xlane.xlu0 %193
    %v195 = vcvt.f32.s32 %v194
    %v196 = vcvt.f32.s32 %v190
    %v197 = vshll.u32 %v196, 16
    %v198 = vadd.s32 %v197, %v195
    %v199 = vand.u32 %v165, 65535
    %v200 = vshra.s32 %v165, 16
    %v201 = vcvt.s32.f32 %v199
    %v202 = vcvt.s32.f32 %v200
    %203 = vmin.xlane.f32.xlu0 %v202
    %v204 = vpop.xlane.xlu0 %203
    %vm205 = vcmp.eq.f32.partialorder %v202, %v204
    %v206 = vsel %vm205, %v201, inf
    %207 = vmin.xlane.f32.xlu0 %v206
    %v208 = vpop.xlane.xlu0 %207
    %v209 = vcvt.f32.s32 %v208
    %v210 = vcvt.f32.s32 %v204
    %v211 = vshll.u32 %v210, 16
    %v212 = vadd.s32 %v211, %v209
    %v213 = vand.u32 %v166, 65535
    %v214 = vshra.s32 %v166, 16
    %v215 = vcvt.s32.f32 %v213
    %v216 = vcvt.s32.f32 %v214
    %217 = vmin.xlane.f32.xlu0 %v216
    %v218 = vpop.xlane.xlu0 %217
    %vm219 = vcmp.eq.f32.partialorder %v216, %v218
    %v220 = vsel %vm219, %v215, inf
    %221 = vmin.xlane.f32.xlu0 %v220
    %v222 = vpop.xlane.xlu0 %221
    %v223 = vcvt.f32.s32 %v222
    %v224 = vcvt.f32.s32 %v218
    %v225 = vshll.u32 %v224, 16
    %v226 = vadd.s32 %v225, %v223
    %v227 = vand.u32 %v167, 65535
    %v228 = vshra.s32 %v167, 16
    %v229 = vcvt.s32.f32 %v227
    %v230 = vcvt.s32.f32 %v228
    %231 = vmin.xlane.f32.xlu0 %v230
    %v232 = vpop.xlane.xlu0 %231
    %vm233 = vcmp.eq.f32.partialorder %v230, %v232
    %v234 = vsel %vm233, %v229, inf
    %235 = vmin.xlane.f32.xlu0 %v234
    %v236 = vpop.xlane.xlu0 %235
    %v237 = vcvt.f32.s32 %v236
    %v238 = vcvt.f32.s32 %v232
    %v239 = vshll.u32 %v238, 16
    %v240 = vadd.s32 %v239, %v237
    %v241 = vand.u32 %v168, 65535
    %v242 = vshra.s32 %v168, 16
    %v243 = vcvt.s32.f32 %v241
    %v244 = vcvt.s32.f32 %v242
    %245 = vmin.xlane.f32.xlu0 %v244
    %v246 = vpop.xlane.xlu0 %245
    %vm247 = vcmp.eq.f32.partialorder %v244, %v246
    %v248 = vsel %vm247, %v243, inf
    %249 = vmin.xlane.f32.xlu0 %v248
    %v250 = vpop.xlane.xlu0 %249
    %v251 = vcvt.f32.s32 %v250
    %v252 = vcvt.f32.s32 %v246
    %v253 = vshll.u32 %v252, 16
    %v254 = vadd.s32 %v253, %v251
    %v255 = vand.u32 %v169, 65535
    %v256 = vshra.s32 %v169, 16
    %v257 = vcvt.s32.f32 %v255
    %v258 = vcvt.s32.f32 %v256
    %259 = vmin.xlane.f32.xlu0 %v258
    %v260 = vpop.xlane.xlu0 %259
    %vm261 = vcmp.eq.f32.partialorder %v258, %v260
    %v262 = vsel %vm261, %v257, inf
    %263 = vmin.xlane.f32.xlu0 %v262
    %v264 = vpop.xlane.xlu0 %263
    %v265 = vcvt.f32.s32 %v264
    %v266 = vcvt.f32.s32 %v260
    %v267 = vshll.u32 %v266, 16
    %v268 = vadd.s32 %v267, %v265
    %v269 = vand.u32 %v170, 65535
    %v270 = vshra.s32 %v170, 16
    %v271 = vcvt.s32.f32 %v269
    %v272 = vcvt.s32.f32 %v270
    %273 = vmin.xlane.f32.xlu0 %v272
    %v274 = vpop.xlane.xlu0 %273
    %vm275 = vcmp.eq.f32.partialorder %v272, %v274
    %v276 = vsel %vm275, %v271, inf
    %277 = vmin.xlane.f32.xlu0 %v276
    %v278 = vpop.xlane.xlu0 %277
    %v279 = vcvt.f32.s32 %v278
    %v280 = vcvt.f32.s32 %v274
    %v281 = vshll.u32 %v280, 16
    %v282 = vadd.s32 %v281, %v279
    %s283 = smul.u32 0, 64
    %v284 = vstv %s283
    %v285 = vadd.s32 %v284, %v131
    %v286 = vadd.s32 %v284, %v132
    %v287 = vadd.s32 %v284, %v133
    %v288 = vadd.s32 %v284, %v134
    %v289 = vadd.s32 %v284, %v135
    %v290 = vadd.s32 %v284, %v136
    %v291 = vadd.s32 %v284, %v137
    %v292 = vadd.s32 %v284, %v138
    %vm293 = vcmp.lt.s32.totalorder %v285, 64
    %vm294 = vcmp.lt.s32.totalorder %v286, 64
    %vm295 = vcmp.lt.s32.totalorder %v287, 64
    %vm296 = vcmp.lt.s32.totalorder %v288, 64
    %vm297 = vcmp.lt.s32.totalorder %v289, 64
    %vm298 = vcmp.lt.s32.totalorder %v290, 64
    %vm299 = vcmp.lt.s32.totalorder %v291, 64
    %vm300 = vcmp.lt.s32.totalorder %v292, 64
    %vm301 = vcmp.eq.s32.totalorder %v129, %v184
    %vm302 = vcmp.eq.s32.totalorder %v129, %v198
    %vm303 = vcmp.eq.s32.totalorder %v129, %v212
    %vm304 = vcmp.eq.s32.totalorder %v129, %v226
    %vm305 = vcmp.eq.s32.totalorder %v129, %v240
    %vm306 = vcmp.eq.s32.totalorder %v129, %v254
    %vm307 = vcmp.eq.s32.totalorder %v129, %v268
    %vm308 = vcmp.eq.s32.totalorder %v129, %v282
    %vm309 = vmand %vm301, %vm293
    %vm310 = vmand %vm302, %vm294
    %vm311 = vmand %vm303, %vm295
    %vm312 = vmand %vm304, %vm296
    %vm313 = vmand %vm305, %vm297
    %vm314 = vmand %vm306, %vm298
    %vm315 = vmand %vm307, %vm299
    %vm316 = vmand %vm308, %vm300
    %v317 = vsel %vm309, 1.0, 0.0
    %v318 = vsel %vm310, 1.0, 0.0
    %v319 = vsel %vm311, 1.0, 0.0
    %v320 = vsel %vm312, 1.0, 0.0
    %v321 = vsel %vm313, 1.0, 0.0
    %v322 = vsel %vm314, 1.0, 0.0
    %v323 = vsel %vm315, 1.0, 0.0
    %v324 = vsel %vm316, 1.0, 0.0
    %v325 = vmax.f32 %v317, %v321
    %v326 = vmax.f32 %v318, %v322
    %v327 = vmax.f32 %v319, %v323
    %v328 = vmax.f32 %v320, %v324
    %v329 = vmax.f32 %v325, %v326
    %v330 = vmax.f32 %v327, %v328
    %v331 = vmax.f32 %v329, %v330
    %v332 = vrot.slane %v331, 4
    %v333 = vmax.f32 %v331, %v332
    %v334 = vrot.slane %v333, 2
    %v335 = vmax.f32 %v333, %v334
    %v336 = vrot.slane %v335, 1
    %v337 = vmax.f32 %v335, %v336
    %338 = vst [vmem:[#allocation7] sm:$0xff] %v337
    // Predicated region
    $region18: #{tpu_custom_call.1} parent=1 // pred_check
      _
    $region19: #{tpu_custom_call.1} parent=1 // pred_check_branch
      %340 = sbr.rel (0) target = $region21
    $region20: #{tpu_custom_call.1} parent=1 // pred_region
      %s342 = ssub.s32 128, 128
      %343 = vsyncadd [#allocation4], %s342
      %s345 = sshll.u32 [#allocation7], 4
      %s346 = int_to_ptr.vmem [resolvable:$true] %s345
      %348 = dma.vmem_to_hbm [thread:$0]  %s346, 128, %s2, [#allocation4]
    $region21: #{tpu_custom_call.1} parent=1 // pred_fallthru
      _
    // Predicated region
    $region22: #{tpu_custom_call.1} parent=1 // pred_check
      _
    $region23: #{tpu_custom_call.1} parent=1 // pred_check_branch
      %350 = sbr.rel (0) target = $region25
    $region24: #{tpu_custom_call.1} parent=1 // pred_region
      %351 = dma.done [#allocation4], 128
    $region25: #{tpu_custom_call.1} parent=1 // pred_fallthru
      _
    %352 = vsyncpa [#allocation3], 1
    %353 = vsyncpa [#allocation6], 1
    %354 = vsyncpa [#allocation4], 1

</llo_original>
